<compile_context>
chip_gen: v7x
topology: tpu7x:2x2x1
jax: 0.10.0
libtpu: 0.0.40
codegen_flags: <defaults>
</compile_context>

<pallas_src>
import math

import numpy as np
import jax
import jax.numpy as jnp
from jax import lax
from jax.experimental import pallas as pl
from jax.experimental.pallas import tpu as pltpu

NUM_CLASSES = 9
NUM_QUBITS = 16
NUM_LAYERS = 29           # number of 2-wire MERA blocks on 16 wires (2*n - 3)
GROUPS = 2                # HOG/PCA/FRAC: input_dim = NUM_QUBITS * 2 -> 2 groups of 16 angles
DIM = 256                 # 2**8 ; (256, 256) statevector tile
HALF = DIM // 2
OUT_LANES = 128           # lane-dense output width (>= NUM_QUBITS and >= NUM_CLASSES)


# ----------------------------------------------------------------------------
# MERA wiring
# ----------------------------------------------------------------------------
def mera_block_indices(n_wires=NUM_QUBITS):
    # TODO(synk): standard binary-MERA layout (top block, then per scale: isometries followed by
    # wrap-around disentanglers).  PennyLane's qml.MERA.compute_indices may order/place blocks
    # differently; this only permutes which synthetic weight pair drives which block.
    blocks = [(0, n_wires // 2)]
    n_levels = int(math.log2(n_wires))
    for lvl in range(n_levels - 2, -1, -1):
        step = 1 << lvl
        wires = list(range(0, n_wires, step))
        m = len(wires)
        for k in range(0, m, 2):                      # "isometries"
            blocks.append((wires[k], wires[k + 1]))
        for k in range(1, m, 2):                      # "disentanglers" (wrap-around at the edge)
            blocks.append((wires[k], wires[(k + 1) % m]))
    return blocks


MERA_BLOCKS = mera_block_indices()
assert len(MERA_BLOCKS) == NUM_LAYERS


def _axis_step(w):
    """(roll axis, stride) for wire w: lanes for w<8, sublanes for w>=8."""
    return (1, 1 << w) if w < 8 else (0, 1 << (w - 8))


# ----------------------------------------------------------------------------
# pltpu.roll direction probe (cached) -- makes the bit-flip roll pairing robust to
# either rotation convention.
# ----------------------------------------------------------------------------
_ROLL_LIKE_JNP = None


def _roll_probe_kernel(x_ref, o_ref):
    o_ref[...] = pltpu.roll(x_ref[...], 1, 1)


def _roll_like_jnp():
    """True iff pltpu.roll(x, s, ax)[i] == x[i - s] (i.e. jnp.roll convention)."""
    global _ROLL_LIKE_JNP
    if _ROLL_LIKE_JNP is None:
        with jax.ensure_compile_time_eval():
            x = jnp.arange(8 * 128, dtype=jnp.float32).reshape(8, 128)
            y = pl.pallas_call(
                _roll_probe_kernel,
                out_shape=jax.ShapeDtypeStruct((8, 128), jnp.float32),
            )(x)
            _ROLL_LIKE_JNP = bool(jax.device_get(y)[0, 1] == 0.0)
    return _ROLL_LIKE_JNP


# ----------------------------------------------------------------------------
# Quantum kernel: exact real statevector sim of AngleEmbedding + MERA, <Z_w> outputs
# ----------------------------------------------------------------------------
def _make_ev_tables():
    """(256,128) lane-dense tables so evs = sum_r [(p2 @ gtab) * mtab][r, :]; cols >=16 are 0."""
    idx = np.arange(DIM)
    bits = (idx[:, None] >> np.arange(8)[None, :]) & 1            # (256, 8)
    sgn = (1.0 - 2.0 * bits).astype(np.float32)                    # (256, 8)
    ones = np.ones((DIM, 8), np.float32)
    gtab = np.zeros((DIM, OUT_LANES), np.float32)
    mtab = np.zeros((DIM, OUT_LANES), np.float32)
    gtab[:, 0:8] = sgn                                             # lane-sign
    gtab[:, 8:16] = ones                                           # row-sum
    mtab[:, 0:8] = ones                                            # pass-thru
    mtab[:, 8:16] = sgn                                            # sublane-sign
    return jnp.asarray(gtab), jnp.asarray(mtab)


def _make_qmera_kernel(roll_like_jnp):
    inv_sqrt2 = float(1.0 / math.sqrt(2.0))

    def kernel(cos_in_ref, sin_in_ref, cos_w_ref, sin_w_ref,   # SMEM scalar-prefetch
               gtab_ref, mtab_ref,                              # VMEM (256, 128) reduction tables
               out_ref):                                        # VMEM (1, 1, 128) output block
        ci = pl.program_id(0)

        # --- tiny per-wire float masks (1.0 where the wire's bit == 1) + complements, hoisted
        col_i = lax.broadcasted_iota(jnp.int32, (1, DIM), 1)    # lane index   (wires 0..7)
        row_i = lax.broadcasted_iota(jnp.int32, (DIM, 1), 0)    # sublane index (wires 8..15)
        maskf, maskc = [], []
        for w in range(NUM_QUBITS):
            if w < 8:
                m = ((col_i >> w) & 1).astype(jnp.float32)       # (1, 256)
            else:
                m = ((row_i >> (w - 8)) & 1).astype(jnp.float32)  # (256, 1)
            maskf.append(m)
            maskc.append(1.0 - m)

        def xor_rolls(x, w):
            """Return (x_minus, x_plus): x at the wire-w bit-flipped index, as the two rolls.
               x_minus (= x[i - s]) is the partner where bit==1, x_plus (= x[i + s]) where bit==0."""
            axis, s = _axis_step(w)
            r_a = pltpu.roll(x, s, axis)          # jnp convention: x[i - s]
            r_b = pltpu.roll(x, DIM - s, axis)    # jnp convention: x[i + s]
            return (r_a, r_b) if roll_like_jnp else (r_b, r_a)

        # --- AngleEmbedding(rotation='Y') on |0..0>: outer product of two product vectors
        colv = jnp.ones((1, DIM), jnp.float32)
        for w in range(8):
            cw = cos_in_ref[ci, w]
            sw = sin_in_ref[ci, w]
            colv = colv * (cw + (sw - cw) * maskf[w])
        rowv = jnp.ones((DIM, 1), jnp.float32)
        for w in range(8, NUM_QUBITS):
            cw = cos_in_ref[ci, w]
            sw = sin_in_ref[ci, w]
            rowv = rowv * (cw + (sw - cw) * maskf[w])
        st = rowv * colv                               # (256, 256) real statevector

        # --- 29 MERA blocks.  Block unitary (RY0 x RY1).CNOT(w0->w1).(H x I) has operator-Schmidt
        #     rank 2:  U = A0 x B0 + A1 x B1 with
        #       A0 = RY0.P0.H = (1/sqrt2)[[c0,c0],[s0,s0]],   B0 = RY1,
        #       A1 = RY0.P1.H = (1/sqrt2)[[-s0,s0],[c0,-c0]], B1 = RY1.X
        #     Per-index application (h/g formulation, validated against the reference):
        #       t0 = B0 st = c1*st + a1*flip1(st),  t1 = B1 st = a1*st + c1*flip1(st), a1 = s1*sgn1
        #       h  = u0*t0 - v0*t1,  g = v0*t0 + u0*t1,   st' = h + flip0(g)
        #       u0 = {c0,s0}/sqrt2 (by bit w0), v0 = {s0,c0}/sqrt2
        #     The flips are never materialized: the two rolls feed mask-folded FMAs directly.
        for b, (w0, w1) in enumerate(MERA_BLOCKS):
            c0 = cos_w_ref[b, 0]
            s0 = sin_w_ref[b, 0]
            c1 = cos_w_ref[b, 1]
            s1 = sin_w_ref[b, 1]
            ax0, step0 = _axis_step(w0)
            ax1, step1 = _axis_step(w1)
            m0, m0c = maskf[w0], maskc[w0]
            m1, m1c = maskf[w1], maskc[w1]

            # small per-block coefficient vectors along w0's / w1's axis (hidden under the rolls)
            u0 = (c0 + (s0 - c0) * m0) * inv_sqrt2
            v0 = (s0 + (c0 - s0) * m0) * inv_sqrt2
            a1 = s1 * (m1 - m1c)                       # s1 * sgn(bit w1)

            if (w0 < 8) == (w1 < 8):
                # both wires on the same (lane or sublane) axis: fold everything into small vecs
                A_h = u0 * c1 - v0 * a1
                B_h = u0 * a1 - v0 * c1
                A_g = v0 * c1 + u0 * a1
                B_g = v0 * a1 + u0 * c1
                if step1 == HALF:                      # XOR with 128 == single rotation by 128
                    r1 = pltpu.roll(st, HALF, ax1)
                    h = A_h * st + B_h * r1
                    g = A_g * st + B_g * r1
                else:
                    r1m, r1p = xor_rolls(st, w1)
                    h = A_h * st + (B_h * m1) * r1m + (B_h * m1c) * r1p
                    g = A_g * st + (B_g * m1) * r1m + (B_g * m1c) * r1p
            else:
                # cross-axis block: t0/t1 must be full tiles (u0/v0 live on the other axis)
                if step1 == HALF:
                    r1 = pltpu.roll(st, HALF, ax1)
                    t0 = c1 * st + a1 * r1
                    t1 = a1 * st + c1 * r1
                else:
                    r1m, r1p = xor_rolls(st, w1)
                    t0 = c1 * st + (s1 * m1) * r1m - (s1 * m1c) * r1p
                    t1 = a1 * st + (c1 * m1) * r1m + (c1 * m1c) * r1p
                h = u0 * t0 - v0 * t1
                g = v0 * t0 + u0 * t1

            if step0 == HALF:
                st = h + pltpu.roll(g, HALF, ax0)
            else:
                g_m, g_p = xor_rolls(g, w0)
                st = h + m0 * g_m + m0c * g_p

        # --- <Z_w> for all 16 wires: one lane-dense MXU matmul + one sublane reduction
        p2 = st * st
        acc = jnp.dot(p2, gtab_ref[...], preferred_element_type=jnp.float32)   # (256, 128)
        evs = jnp.sum(acc * mtab_ref[...], axis=0, keepdims=True)               # (1, 128)
        out_ref[0] = evs                                                         # unmasked store

    return kernel


def quantum_mera_expvals(cos_in, sin_in, cos_w, sin_w):
    nc = cos_in.shape[0]          # nc = B * GROUPS is always even -> balanced v7x TC split
    gtab, mtab = _make_ev_tables()
    kernel = _make_qmera_kernel(_roll_like_jnp())
    grid_spec = pltpu.PrefetchScalarGridSpec(
        num_scalar_prefetch=4,
        grid=(nc,),
        in_specs=[pl.BlockSpec((DIM, OUT_LANES), lambda g, *_: (0, 0)),
                  pl.BlockSpec((DIM, OUT_LANES), lambda g, *_: (0, 0))],
        out_specs=pl.BlockSpec((1, 1, OUT_LANES), lambda g, *_: (g, 0, 0)),
    )
    out = pl.pallas_call(
        kernel,
        out_shape=jax.ShapeDtypeStruct((nc, 1, OUT_LANES), jnp.float32),
        grid_spec=grid_spec,
        compiler_params=pltpu.CompilerParams(
            dimension_semantics=("parallel",),     # circuits are independent (2 TCs on v7x)
        ),
    )(cos_in, sin_in, cos_w, sin_w, gtab, mtab)
    return out.reshape(nc, OUT_LANES)[:, :NUM_QUBITS]


# ----------------------------------------------------------------------------
# Classifier kernel: Linear(+folded BN)->ReLU (x3) -> Linear   (inference semantics)
# All weight lane dims are zero-padded to 128 so every matmul / store is unmasked.
# ----------------------------------------------------------------------------
def _mlp_kernel(x_ref, w1_ref, b1_ref, w2_ref, b2_ref, w3_ref, b3_ref, w4_ref, b4_ref, o_ref):
    # TODO(synk): Dropout(0.3/0.2) and train-mode BatchNorm batch statistics are modeled as
    # inference no-ops / running-stat affine folded into the Linear weights.
    h = x_ref[...]
    h = jnp.maximum(jnp.dot(h, w1_ref[...], preferred_element_type=jnp.float32) + b1_ref[...], 0.0)
    h = jnp.maximum(jnp.dot(h, w2_ref[...], preferred_element_type=jnp.float32) + b2_ref[...], 0.0)
    h = jnp.maximum(jnp.dot(h, w3_ref[...], preferred_element_type=jnp.float32) + b3_ref[...], 0.0)
    o_ref[...] = jnp.dot(h, w4_ref[...], preferred_element_type=jnp.float32) + b4_ref[...]


def classifier_forward(q, p):
    eps = 1e-5
    L = OUT_LANES

    def fold(w, b, gamma, beta, mean, var):
        scale = gamma / jnp.sqrt(var + eps)
        return w * scale[None, :], b * scale + (beta - mean * scale)

    w1, b1 = fold(p["w1"], p["b1"], p["bn1_g"], p["bn1_b"], p["bn1_m"], p["bn1_v"])
    w2, b2 = fold(p["w2"], p["b2"], p["bn2_g"], p["bn2_b"], p["bn2_m"], p["bn2_v"])
    w3, b3 = fold(p["w3"], p["b3"], p["bn3_g"], p["bn3_b"], p["bn3_m"], p["bn3_v"])

    # zero-pad every lane (output) dim -- and matching fan-in rows -- up to 128
    w2 = jnp.pad(w2, ((0, 0), (0, L - w2.shape[1])))                       # (128, 128)
    b2 = jnp.pad(b2, (0, L - b2.shape[0]))
    w3 = jnp.pad(w3, ((0, L - w3.shape[0]), (0, L - w3.shape[1])))          # (128, 128)
    b3 = jnp.pad(b3, (0, L - b3.shape[0]))
    w4 = jnp.pad(p["w4"], ((0, L - p["w4"].shape[0]), (0, L - p["w4"].shape[1])))   # (128, 128)
    b4 = jnp.pad(p["b4"], (0, L - p["b4"].shape[0]))

    args = [q,
            w1, b1.reshape(1, -1),
            w2, b2.reshape(1, -1),
            w3, b3.reshape(1, -1),
            w4, b4.reshape(1, -1)]

    B = q.shape[0]
    # TODO(synk): for large B, tile over the batch dim (grid=(cdiv(B,256),), "parallel") instead
    # of one whole-array block.
    out = pl.pallas_call(
        _mlp_kernel,
        out_shape=jax.ShapeDtypeStruct((B, L), jnp.float32),
        grid=(1,),
        in_specs=[pl.BlockSpec(a.shape, lambda i: (0, 0)) for a in args],
        out_specs=pl.BlockSpec((B, L), lambda i: (0, 0)),
    )(*args)
    return out[:, :NUM_CLASSES]


# ----------------------------------------------------------------------------
# Parameters & forward
# ----------------------------------------------------------------------------
def init_params(key):
    ks = jax.random.split(key, 8)

    def lin(k, fan_in, fan_out):
        bound = 1.0 / math.sqrt(fan_in)
        kw, kb = jax.random.split(k)
        w = jax.random.uniform(kw, (fan_in, fan_out), jnp.float32, -bound, bound)
        b = jax.random.uniform(kb, (fan_out,), jnp.float32, -bound, bound)
        return w, b

    def bn(k, n):
        k1, k2, k3, k4 = jax.random.split(k, 4)
        gamma = 1.0 + 0.1 * jax.random.normal(k1, (n,), jnp.float32)
        beta = 0.1 * jax.random.normal(k2, (n,), jnp.float32)
        mean = 0.1 * jax.random.normal(k3, (n,), jnp.float32)
        var = 1.0 + 0.1 * jax.random.uniform(k4, (n,), jnp.float32)
        return gamma, beta, mean, var

    p = {}
    # TODO(synk): original weight_shapes give (29, 8, 2); qml.MERA semantically consumes
    # (n_blocks=29, n_params_block=2) angles, which is what is used here.
    p["mera_w"] = jax.random.uniform(ks[0], (NUM_LAYERS, 2), jnp.float32, 0.0, 2.0 * math.pi)
    p["w1"], p["b1"] = lin(ks[1], GROUPS * NUM_QUBITS, 128)
    p["bn1_g"], p["bn1_b"], p["bn1_m"], p["bn1_v"] = bn(ks[2], 128)
    p["w2"], p["b2"] = lin(ks[3], 128, 64)
    p["bn2_g"], p["bn2_b"], p["bn2_m"], p["bn2_v"] = bn(ks[4], 64)
    p["w3"], p["b3"] = lin(ks[5], 64, 32)
    p["bn3_g"], p["bn3_b"], p["bn3_m"], p["bn3_v"] = bn(ks[6], 32)
    p["w4"], p["b4"] = lin(ks[7], 32, NUM_CLASSES)
    return p


def quantum_features(x, params):
    # TODO(synk): only the HOG/PCA/FRAC path (input_dim = 32 -> 2 circuits of 16 angles) is
    # implemented; the 'PATCH' path is not.
    B = x.shape[0]
    angles = x.reshape(-1, NUM_QUBITS).astype(jnp.float32)       # (B*GROUPS, 16) RY angles
    cos_in = jnp.cos(0.5 * angles)
    sin_in = jnp.sin(0.5 * angles)
    cos_w = jnp.cos(0.5 * params["mera_w"])
    sin_w = jnp.sin(0.5 * params["mera_w"])
    q = quantum_mera_expvals(cos_in, sin_in, cos_w, sin_w)       # (B*GROUPS, 16)
    return q.reshape(B, GROUPS * NUM_QUBITS)                     # (B, 32) qnn features


@jax.jit
def _forward_jit(x, params):
    q = quantum_features(x, params)
    return classifier_forward(q, params)                         # (B, 9) logits


def hybrid_model_forward(x, params):
    _roll_like_jnp()          # resolve pltpu.roll convention outside of jit tracing (cached)
    return _forward_jit(x, params)


# ----------------------------------------------------------------------------
# Pure-JAX reference (exact statevector sim + eval-mode classifier) for validation
# ----------------------------------------------------------------------------
def _reference_qnode(angles, mera_w):
    angles = jnp.asarray(angles, jnp.float32)
    nc = angles.shape[0]
    n_states = 2 ** NUM_QUBITS
    c = jnp.cos(0.5 * angles)
    s = jnp.sin(0.5 * angles)

    # AngleEmbedding-Y product state; flat index: bit w (weight 2**w) == wire w
    v = jnp.ones((nc, 1), jnp.float32)
    for w in range(NUM_QUBITS - 1, -1, -1):
        pair = jnp.stack([c[:, w], s[:, w]], axis=1)
        v = (v[:, :, None] * pair[:, None, :]).reshape(nc, -1)

    def apply_1q(v, G, w):
        inner = 1 << w
        outer = n_states // (2 * inner)
        v = v.reshape(nc, outer, 2, inner)
        a0, a1 = v[:, :, 0, :], v[:, :, 1, :]
        v = jnp.stack([G[0, 0] * a0 + G[0, 1] * a1,
                       G[1, 0] * a0 + G[1, 1] * a1], axis=2)
        return v.reshape(nc, -1)

    def apply_cnot(v, wc, wt):
        hi, lo = max(wc, wt), min(wc, wt)
        C = 1 << lo
        Bm = 1 << (hi - lo - 1)
        A = n_states // (4 * C * Bm)
        v = v.reshape(nc, A, 2, Bm, 2, C)         # axis 2 = bit hi, axis 4 = bit lo
        if wc == hi:
            flipped = v[:, :, 1, :, ::-1, :]
            v = jnp.stack([v[:, :, 0], flipped], axis=2)
        else:
            flipped = v[:, :, ::-1, :, 1, :]
            v = jnp.stack([v[:, :, :, :, 0, :], flipped], axis=4)
        return v.reshape(nc, -1)

    H = jnp.asarray(np.array([[1.0, 1.0], [1.0, -1.0]]) / np.sqrt(2.0), jnp.float32)
    for b, (w0, w1) in enumerate(MERA_BLOCKS):
        v = apply_1q(v, H, w0)
        v = apply_cnot(v, w0, w1)
        c0, s0 = jnp.cos(0.5 * mera_w[b, 0]), jnp.sin(0.5 * mera_w[b, 0])
        c1, s1 = jnp.cos(0.5 * mera_w[b, 1]), jnp.sin(0.5 * mera_w[b, 1])
        RY0 = jnp.stack([jnp.stack([c0, -s0]), jnp.stack([s0, c0])])
        RY1 = jnp.stack([jnp.stack([c1, -s1]), jnp.stack([s1, c1])])
        v = apply_1q(v, RY0, w0)
        v = apply_1q(v, RY1, w1)

    probs = v * v
    idx = np.arange(n_states)
    signs = (1.0 - 2.0 * ((idx[:, None] >> np.arange(NUM_QUBITS)[None, :]) & 1)).astype(np.float32)
    return jnp.einsum("ni,iw->nw", probs, jnp.asarray(signs),
                      precision=lax.Precision.HIGHEST)


def _reference_classifier(q, p):
    eps = 1e-5

    def dense_bn_relu(h, w, b, g_, beta_, m_, v_):
        h = jnp.dot(h, w, precision=lax.Precision.HIGHEST) + b
        h = (h - m_) / jnp.sqrt(v_ + eps) * g_ + beta_
        return jnp.maximum(h, 0.0)

    h = dense_bn_relu(q, p["w1"], p["b1"], p["bn1_g"], p["bn1_b"], p["bn1_m"], p["bn1_v"])
    h = dense_bn_relu(h, p["w2"], p["b2"], p["bn2_g"], p["bn2_b"], p["bn2_m"], p["bn2_v"])
    h = dense_bn_relu(h, p["w3"], p["b3"], p["bn3_g"], p["bn3_b"], p["bn3_m"], p["bn3_v"])
    return jnp.dot(h, p["w4"], precision=lax.Precision.HIGHEST) + p["b4"]


if __name__ == "__main__":
    key = jax.random.PRNGKey(0)
    kx, kp = jax.random.split(key)
    B = 2
    x = jax.random.uniform(kx, (B, GROUPS, NUM_QUBITS), jnp.float32, 0.0, math.pi)
    params = init_params(kp)

    out = hybrid_model_forward(x, params)
    out = jax.block_until_ready(out)
    assert out.shape == (B, NUM_CLASSES) and out.dtype == jnp.float32

    # Validate against a pure-JAX exact statevector + eval-mode classifier reference.
    q_pallas = np.asarray(quantum_features(x, params))
    q_ref = np.asarray(_reference_qnode(x.reshape(-1, NUM_QUBITS), params["mera_w"]))
    q_ref = q_ref.reshape(B, GROUPS * NUM_QUBITS)
    np.testing.assert_allclose(q_pallas, q_ref, atol=2e-3, rtol=2e-3)
    logits_ref = np.asarray(_reference_classifier(jnp.asarray(q_ref), params))
    np.testing.assert_allclose(np.asarray(out), logits_ref, atol=2e-2, rtol=2e-2)

    print("KERNEL_OK")
</pallas_src>

<mosaic_0001>
module attributes {stable_mosaic.version = 11 : i64} {
  func.func @_roll_probe_kernel(%arg0: memref<8x128xf32, #tpu.memory_space<vmem>>, %arg1: memref<8x128xf32, #tpu.memory_space<vmem>>) attributes {dimension_semantics = [], scalar_prefetch = 0 : i64, scratch_operands = 0 : i64, tpu.core_type = #tpu.core_type<tc>} {
    %c0 = arith.constant 0 : index
    %c0_0 = arith.constant 0 : index
    %0 = vector.load %arg0[%c0, %c0_0] : memref<8x128xf32, #tpu.memory_space<vmem>>, vector<8x128xf32>
    %c1_i32 = arith.constant 1 : i32
    %1 = tpu.dynamic_rotate %0 by %c1_i32 dim 1 : vector<8x128xf32>, i32 -> vector<8x128xf32>
    %c0_1 = arith.constant 0 : index
    %c0_2 = arith.constant 0 : index
    %2 = vector.load %arg1[%c0_1, %c0_2] : memref<8x128xf32, #tpu.memory_space<vmem>>, vector<8x128xf32>
    tpu.vector_store %arg1[%c0_1, %c0_2], %1 {strides = array<i32>} : memref<8x128xf32, #tpu.memory_space<vmem>>, vector<8x128xf32>,
    return
  }
}

</mosaic_0001>

<llo_original>
// kernel: tpu_custom_call.1
$region0: #{tpu_custom_call.1}
  #allocation0 [shape = 'u32[]', space=smem, size = 0x4, offset = 0x4, fixed_abs, tag = 'smem constant byte address 0x4 - core index']
  #allocation1 [shape = 'u32[144,128]{1,0:T(1,128)}', space=vmem, size = 0x12000, scoped, tag = 'internal scratch']
  %s0 = inlined_call_operand.hbm [shape: f32[8,128], index: 0, kind: input, shape index: {}]
  %s1 = inlined_call_operand.hbm [shape: f32[8,128], index: 1, kind: output, shape index: {}]
  %s2 = sld [smem:[#allocation0]]
  $region18: #{tpu_custom_call.1} parent=0
    _
  %s4 = ssub.s32 1, %s2
  %s5 = scalar_select 0, %s4, %s2
  $region1: #{tpu_custom_call.1} parent=0
    #allocation2 [shape = 'u8[4096]{0}', space=vmem, size = 0x1000, scoped, tag = 'input window, operand 0, single buffered']
    #allocation3 [shape = 's32[1]{0}', space=sflag, size = 0x4, scoped, tag = 'scoped memory for tpu_custom_call.1']
    #allocation4 [shape = 's32[1]{0}', space=sflag, size = 0x4, scoped, tag = 'scoped memory for tpu_custom_call.1']
    #allocation5 [shape = 'u8[4096]{0}', space=vmem, size = 0x1000, scoped, tag = 'output window, operand 0, single buffered']
    %6 = vsyncpa [#allocation3], 0
    %7 = vsyncpa [#allocation4], 0
    // Predicated region
    $region2: #{tpu_custom_call.1} parent=1 // pred_check
      _
    $region3: #{tpu_custom_call.1} parent=1 // pred_check_branch
      %9 = sbr.rel (0) target = $region5
    $region4: #{tpu_custom_call.1} parent=1 // pred_region
      %s11 = ssub.s32 128, 128
      %12 = vsyncadd [#allocation3], %s11
      %s14 = sshll.u32 [#allocation2], 4
      %s15 = int_to_ptr.vmem [resolvable:$true] %s14
      %17 = dma.hbm_to_vmem [thread:$0]  %s0, 128, %s15, [#allocation3]
    $region5: #{tpu_custom_call.1} parent=1 // pred_fallthru
      _
    // Predicated region
    $region6: #{tpu_custom_call.1} parent=1 // pred_check
      _
    $region7: #{tpu_custom_call.1} parent=1 // pred_check_branch
      %19 = sbr.rel (0) target = $region9
    $region8: #{tpu_custom_call.1} parent=1 // pred_region
      %20 = dma.done [#allocation3], 128
    $region9: #{tpu_custom_call.1} parent=1 // pred_fallthru
      _
    %v21 = vld [vmem:[#allocation2] sm:$0xff]
    %22 = vrot.lane.b32.xlu0 %v21, 1
    %v23 = vpop.permute.xlu0 %22
    %24 = vst [vmem:[#allocation5] sm:$0xff] %v23
    // Predicated region
    $region10: #{tpu_custom_call.1} parent=1 // pred_check
      _
    $region11: #{tpu_custom_call.1} parent=1 // pred_check_branch
      %26 = sbr.rel (0) target = $region13
    $region12: #{tpu_custom_call.1} parent=1 // pred_region
      %s28 = ssub.s32 128, 128
      %29 = vsyncadd [#allocation4], %s28
      %s31 = sshll.u32 [#allocation5], 4
      %s32 = int_to_ptr.vmem [resolvable:$true] %s31
      %34 = dma.vmem_to_hbm [thread:$0]  %s32, 128, %s1, [#allocation4]
    $region13: #{tpu_custom_call.1} parent=1 // pred_fallthru
      _
    // Predicated region
    $region14: #{tpu_custom_call.1} parent=1 // pred_check
      _
    $region15: #{tpu_custom_call.1} parent=1 // pred_check_branch
      %36 = sbr.rel (0) target = $region17
    $region16: #{tpu_custom_call.1} parent=1 // pred_region
      %37 = dma.done [#allocation4], 128
    $region17: #{tpu_custom_call.1} parent=1 // pred_fallthru
      _
    %38 = vsyncpa [#allocation3], 1
    %39 = vsyncpa [#allocation4], 1

</llo_original>
